<compile_context>
chip_gen: v7x
topology: tpu7x:2x2x1
jax: 0.10.0
libtpu: 0.0.40
codegen_flags: <defaults>
</compile_context>

<pallas_src>
import jax
import jax.numpy as jnp
from jax.experimental import pallas as pl
from jax.experimental.pallas import tpu as pltpu


_CHUNK = 1024  # lanes processed per inner (unrolled) step; bounds vreg pressure


def _round_up(v, m):
    return ((v + m - 1) // m) * m


def _head_kernel(w_ref, b_ref, x_ref, o_ref):
    # w_ref : SMEM (K, C) f32   (scalar weights, broadcast to lanes)
    # b_ref : SMEM (K,)   f32
    # x_ref : VMEM (C, TL)      (spatial tile on lanes)
    # o_ref : VMEM (K, TL)
    n_cls, n_ch = w_ref.shape
    tl = x_ref.shape[1]
    for off in range(0, tl, _CHUNK):
        size = min(_CHUNK, tl - off)           # static; multiple of 128
        for k in range(n_cls):
            acc = jnp.full((1, size), b_ref[k], dtype=jnp.float32)
            for c in range(n_ch):
                acc = acc + w_ref[k, c] * x_ref[c:c + 1, off:off + size].astype(
                    jnp.float32)
            o_ref[k:k + 1, off:off + size] = acc.astype(o_ref.dtype)


def pervise_head_pallas(x_nchw, weight, bias, *, lane_tile=16384):
    """perviseHead forward: Dropout2d(p=0.1) [eval = identity] + 1x1 Conv2d.

    x_nchw : (N, C, H, W)
    weight : (K, C)   -- PyTorch Conv2d weight (K, C, 1, 1) squeezed
    bias   : (K,)
    returns (N, K, H, W) with dtype of x_nchw.
    """
    N, C, H, W = x_nchw.shape
    K = weight.shape[0]
    L = H * W

    # NCHW -> (N, C, H*W): trailing-dim reshape only, no HBM shuffle.
    x = x_nchw.reshape(N, C, L)

    # Spatial tiling: lane tile is a multiple of 128, close to `lane_tile`,
    # chosen to minimize zero-padding.
    L128 = _round_up(L, 128)
    ntiles = max(1, -(-L128 // lane_tile))
    tl = _round_up(-(-L128 // ntiles), 128)
    L_pad = tl * ntiles
    if L_pad != L:
        x = jnp.pad(x, ((0, 0), (0, 0), (0, L_pad - L)))

    # Tiny weight/bias live in SMEM as f32 scalars (resident for every tile).
    w_smem = weight.astype(jnp.float32)      # (K, C)
    b_smem = bias.astype(jnp.float32)        # (K,)

    out = pl.pallas_call(
        _head_kernel,
        out_shape=jax.ShapeDtypeStruct((N, K, L_pad), x.dtype),
        grid=(N, ntiles),
        in_specs=[
            pl.BlockSpec(memory_space=pltpu.MemorySpace.SMEM),     # weight
            pl.BlockSpec(memory_space=pltpu.MemorySpace.SMEM),     # bias
            pl.BlockSpec((None, C, tl), lambda n, l: (n, 0, l)),   # x tile
        ],
        out_specs=pl.BlockSpec((None, K, tl), lambda n, l: (n, 0, l)),
        compiler_params=pltpu.CompilerParams(
            dimension_semantics=("parallel", "parallel")),
    )(w_smem, b_smem, x)

    return out[:, :, :L].reshape(N, K, H, W)


def pervise_head_ref(x_nchw, weight, bias):
    # Pure-JAX reference: 1x1 conv == einsum over the channel axis.
    y = jnp.einsum("nchw,kc->nkhw", x_nchw.astype(jnp.float32),
                   weight.astype(jnp.float32))
    return (y + bias[None, :, None, None]).astype(x_nchw.dtype)


if __name__ == "__main__":
    key = jax.random.PRNGKey(0)
    N, C, H, W = 2, 4, 16, 16       # in_channel = 4
    n_classes = 3

    kx, kw, kb = jax.random.split(key, 3)
    x = jax.random.normal(kx, (N, C, H, W), dtype=jnp.float32)

    # Deterministic parameter init (mimics Conv2d default uniform bound 1/sqrt(C)).
    bound = 1.0 / jnp.sqrt(jnp.float32(C))
    weight = jax.random.uniform(kw, (n_classes, C), jnp.float32, -bound, bound)
    bias = jax.random.uniform(kb, (n_classes,), jnp.float32, -bound, bound)

    out = jax.block_until_ready(pervise_head_pallas(x, weight, bias))
    ref = pervise_head_ref(x, weight, bias)
    assert out.shape == (N, n_classes, H, W), out.shape
    assert jnp.allclose(out, ref, atol=1e-5, rtol=1e-5), "mismatch vs reference"

    # Second case: H*W not a multiple of 128 exercises the lane-padding path.
    N2, C2, H2, W2, K2 = 1, 6, 10, 10, 5
    k2x, k2w, k2b = jax.random.split(jax.random.PRNGKey(1), 3)
    x2 = jax.random.normal(k2x, (N2, C2, H2, W2), dtype=jnp.float32)
    w2 = jax.random.uniform(k2w, (K2, C2), jnp.float32, -0.5, 0.5)
    b2 = jax.random.uniform(k2b, (K2,), jnp.float32, -0.5, 0.5)
    out2 = jax.block_until_ready(pervise_head_pallas(x2, w2, b2))
    ref2 = pervise_head_ref(x2, w2, b2)
    assert out2.shape == (N2, K2, H2, W2), out2.shape
    assert jnp.allclose(out2, ref2, atol=1e-5, rtol=1e-5), "mismatch vs reference (padded case)"

    print("KERNEL_OK")
</pallas_src>

<mosaic_0001>
module attributes {stable_mosaic.version = 11 : i64} {
  func.func @_head_kernel(%arg0: i32, %arg1: i32, %arg2: memref<3x4xf32, #tpu.memory_space<smem>>, %arg3: memref<3xf32, #tpu.memory_space<smem>>, %arg4: memref<1x4x256xf32, #tpu.memory_space<vmem>>, %arg5: memref<1x3x256xf32, #tpu.memory_space<vmem>>) attributes {dimension_semantics = [#tpu.dimension_semantics<parallel>, #tpu.dimension_semantics<parallel>], iteration_bounds = array<i64: 2, 1>, scalar_prefetch = 0 : i64, scratch_operands = 0 : i64, tpu.core_type = #tpu.core_type<tc>, window_params = [{transform_indices = @transform_0, window_bounds = array<i64: 3, 4>}, {transform_indices = @transform_1, window_bounds = array<i64: 3>}, {transform_indices = @transform_2, window_bounds = array<i64: 1, 4, 256>}, {transform_indices = @transform_3, window_bounds = array<i64: 1, 3, 256>}]} {
    %c0 = arith.constant 0 : index
    %0 = memref.load %arg3[%c0] : memref<3xf32, #tpu.memory_space<smem>>
    %1 = vector.broadcast %0 : f32 to vector<1x256xf32>
    %c0_0 = arith.constant 0 : index
    %c0_1 = arith.constant 0 : index
    %2 = memref.load %arg2[%c0_0, %c0_1] : memref<3x4xf32, #tpu.memory_space<smem>>
    %c0_2 = arith.constant 0 : index
    %c0_3 = arith.constant 0 : index
    %c0_4 = arith.constant 0 : index
    %3 = vector.load %arg4[%c0_2, %c0_3, %c0_4] : memref<1x4x256xf32, #tpu.memory_space<vmem>>, vector<1x1x256xf32>
    %4 = vector.shape_cast %3 : vector<1x1x256xf32> to vector<1x256xf32>
    %5 = vector.broadcast %2 : f32 to vector<1x256xf32>
    %6 = arith.mulf %5, %4 : vector<1x256xf32>
    %7 = arith.addf %1, %6 : vector<1x256xf32>
    %c0_5 = arith.constant 0 : index
    %c1 = arith.constant 1 : index
    %8 = memref.load %arg2[%c0_5, %c1] : memref<3x4xf32, #tpu.memory_space<smem>>
    %c0_6 = arith.constant 0 : index
    %c1_7 = arith.constant 1 : index
    %c0_8 = arith.constant 0 : index
    %9 = vector.load %arg4[%c0_6, %c1_7, %c0_8] : memref<1x4x256xf32, #tpu.memory_space<vmem>>, vector<1x1x256xf32>
    %10 = vector.shape_cast %9 : vector<1x1x256xf32> to vector<1x256xf32>
    %11 = vector.broadcast %8 : f32 to vector<1x256xf32>
    %12 = arith.mulf %11, %10 : vector<1x256xf32>
    %13 = arith.addf %7, %12 : vector<1x256xf32>
    %c0_9 = arith.constant 0 : index
    %c2 = arith.constant 2 : index
    %14 = memref.load %arg2[%c0_9, %c2] : memref<3x4xf32, #tpu.memory_space<smem>>
    %c0_10 = arith.constant 0 : index
    %c2_11 = arith.constant 2 : index
    %c0_12 = arith.constant 0 : index
    %15 = vector.load %arg4[%c0_10, %c2_11, %c0_12] : memref<1x4x256xf32, #tpu.memory_space<vmem>>, vector<1x1x256xf32>
    %16 = vector.shape_cast %15 : vector<1x1x256xf32> to vector<1x256xf32>
    %17 = vector.broadcast %14 : f32 to vector<1x256xf32>
    %18 = arith.mulf %17, %16 : vector<1x256xf32>
    %19 = arith.addf %13, %18 : vector<1x256xf32>
    %c0_13 = arith.constant 0 : index
    %c3 = arith.constant 3 : index
    %20 = memref.load %arg2[%c0_13, %c3] : memref<3x4xf32, #tpu.memory_space<smem>>
    %c0_14 = arith.constant 0 : index
    %c3_15 = arith.constant 3 : index
    %c0_16 = arith.constant 0 : index
    %21 = vector.load %arg4[%c0_14, %c3_15, %c0_16] : memref<1x4x256xf32, #tpu.memory_space<vmem>>, vector<1x1x256xf32>
    %22 = vector.shape_cast %21 : vector<1x1x256xf32> to vector<1x256xf32>
    %23 = vector.broadcast %20 : f32 to vector<1x256xf32>
    %24 = arith.mulf %23, %22 : vector<1x256xf32>
    %25 = arith.addf %19, %24 : vector<1x256xf32>
    %c0_17 = arith.constant 0 : index
    %c0_18 = arith.constant 0 : index
    %c0_19 = arith.constant 0 : index
    %26 = vector.load %arg5[%c0_17, %c0_18, %c0_19] : memref<1x3x256xf32, #tpu.memory_space<vmem>>, vector<1x1x256xf32>
    %27 = vector.shape_cast %26 : vector<1x1x256xf32> to vector<1x256xf32>
    %28 = vector.shape_cast %25 : vector<1x256xf32> to vector<1x1x256xf32>
    tpu.vector_store %arg5[%c0_17, %c0_18, %c0_19], %28 {strides = array<i32>} : memref<1x3x256xf32, #tpu.memory_space<vmem>>, vector<1x1x256xf32>,
    %c1_20 = arith.constant 1 : index
    %29 = memref.load %arg3[%c1_20] : memref<3xf32, #tpu.memory_space<smem>>
    %30 = vector.broadcast %29 : f32 to vector<1x256xf32>
    %c1_21 = arith.constant 1 : index
    %c0_22 = arith.constant 0 : index
    %31 = memref.load %arg2[%c1_21, %c0_22] : memref<3x4xf32, #tpu.memory_space<smem>>
    %c0_23 = arith.constant 0 : index
    %c0_24 = arith.constant 0 : index
    %c0_25 = arith.constant 0 : index
    %32 = vector.load %arg4[%c0_23, %c0_24, %c0_25] : memref<1x4x256xf32, #tpu.memory_space<vmem>>, vector<1x1x256xf32>
    %33 = vector.shape_cast %32 : vector<1x1x256xf32> to vector<1x256xf32>
    %34 = vector.broadcast %31 : f32 to vector<1x256xf32>
    %35 = arith.mulf %34, %33 : vector<1x256xf32>
    %36 = arith.addf %30, %35 : vector<1x256xf32>
    %c1_26 = arith.constant 1 : index
    %c1_27 = arith.constant 1 : index
    %37 = memref.load %arg2[%c1_26, %c1_27] : memref<3x4xf32, #tpu.memory_space<smem>>
    %c0_28 = arith.constant 0 : index
    %c1_29 = arith.constant 1 : index
    %c0_30 = arith.constant 0 : index
    %38 = vector.load %arg4[%c0_28, %c1_29, %c0_30] : memref<1x4x256xf32, #tpu.memory_space<vmem>>, vector<1x1x256xf32>
    %39 = vector.shape_cast %38 : vector<1x1x256xf32> to vector<1x256xf32>
    %40 = vector.broadcast %37 : f32 to vector<1x256xf32>
    %41 = arith.mulf %40, %39 : vector<1x256xf32>
    %42 = arith.addf %36, %41 : vector<1x256xf32>
    %c1_31 = arith.constant 1 : index
    %c2_32 = arith.constant 2 : index
    %43 = memref.load %arg2[%c1_31, %c2_32] : memref<3x4xf32, #tpu.memory_space<smem>>
    %c0_33 = arith.constant 0 : index
    %c2_34 = arith.constant 2 : index
    %c0_35 = arith.constant 0 : index
    %44 = vector.load %arg4[%c0_33, %c2_34, %c0_35] : memref<1x4x256xf32, #tpu.memory_space<vmem>>, vector<1x1x256xf32>
    %45 = vector.shape_cast %44 : vector<1x1x256xf32> to vector<1x256xf32>
    %46 = vector.broadcast %43 : f32 to vector<1x256xf32>
    %47 = arith.mulf %46, %45 : vector<1x256xf32>
    %48 = arith.addf %42, %47 : vector<1x256xf32>
    %c1_36 = arith.constant 1 : index
    %c3_37 = arith.constant 3 : index
    %49 = memref.load %arg2[%c1_36, %c3_37] : memref<3x4xf32, #tpu.memory_space<smem>>
    %c0_38 = arith.constant 0 : index
    %c3_39 = arith.constant 3 : index
    %c0_40 = arith.constant 0 : index
    %50 = vector.load %arg4[%c0_38, %c3_39, %c0_40] : memref<1x4x256xf32, #tpu.memory_space<vmem>>, vector<1x1x256xf32>
    %51 = vector.shape_cast %50 : vector<1x1x256xf32> to vector<1x256xf32>
    %52 = vector.broadcast %49 : f32 to vector<1x256xf32>
    %53 = arith.mulf %52, %51 : vector<1x256xf32>
    %54 = arith.addf %48, %53 : vector<1x256xf32>
    %c0_41 = arith.constant 0 : index
    %c1_42 = arith.constant 1 : index
    %c0_43 = arith.constant 0 : index
    %55 = vector.load %arg5[%c0_41, %c1_42, %c0_43] : memref<1x3x256xf32, #tpu.memory_space<vmem>>, vector<1x1x256xf32>
    %56 = vector.shape_cast %55 : vector<1x1x256xf32> to vector<1x256xf32>
    %57 = vector.shape_cast %54 : vector<1x256xf32> to vector<1x1x256xf32>
    tpu.vector_store %arg5[%c0_41, %c1_42, %c0_43], %57 {strides = array<i32>} : memref<1x3x256xf32, #tpu.memory_space<vmem>>, vector<1x1x256xf32>,
    %c2_44 = arith.constant 2 : index
    %58 = memref.load %arg3[%c2_44] : memref<3xf32, #tpu.memory_space<smem>>
    %59 = vector.broadcast %58 : f32 to vector<1x256xf32>
    %c2_45 = arith.constant 2 : index
    %c0_46 = arith.constant 0 : index
    %60 = memref.load %arg2[%c2_45, %c0_46] : memref<3x4xf32, #tpu.memory_space<smem>>
    %c0_47 = arith.constant 0 : index
    %c0_48 = arith.constant 0 : index
    %c0_49 = arith.constant 0 : index
    %61 = vector.load %arg4[%c0_47, %c0_48, %c0_49] : memref<1x4x256xf32, #tpu.memory_space<vmem>>, vector<1x1x256xf32>
    %62 = vector.shape_cast %61 : vector<1x1x256xf32> to vector<1x256xf32>
    %63 = vector.broadcast %60 : f32 to vector<1x256xf32>
    %64 = arith.mulf %63, %62 : vector<1x256xf32>
    %65 = arith.addf %59, %64 : vector<1x256xf32>
    %c2_50 = arith.constant 2 : index
    %c1_51 = arith.constant 1 : index
    %66 = memref.load %arg2[%c2_50, %c1_51] : memref<3x4xf32, #tpu.memory_space<smem>>
    %c0_52 = arith.constant 0 : index
    %c1_53 = arith.constant 1 : index
    %c0_54 = arith.constant 0 : index
    %67 = vector.load %arg4[%c0_52, %c1_53, %c0_54] : memref<1x4x256xf32, #tpu.memory_space<vmem>>, vector<1x1x256xf32>
    %68 = vector.shape_cast %67 : vector<1x1x256xf32> to vector<1x256xf32>
    %69 = vector.broadcast %66 : f32 to vector<1x256xf32>
    %70 = arith.mulf %69, %68 : vector<1x256xf32>
    %71 = arith.addf %65, %70 : vector<1x256xf32>
    %c2_55 = arith.constant 2 : index
    %c2_56 = arith.constant 2 : index
    %72 = memref.load %arg2[%c2_55, %c2_56] : memref<3x4xf32, #tpu.memory_space<smem>>
    %c0_57 = arith.constant 0 : index
    %c2_58 = arith.constant 2 : index
    %c0_59 = arith.constant 0 : index
    %73 = vector.load %arg4[%c0_57, %c2_58, %c0_59] : memref<1x4x256xf32, #tpu.memory_space<vmem>>, vector<1x1x256xf32>
    %74 = vector.shape_cast %73 : vector<1x1x256xf32> to vector<1x256xf32>
    %75 = vector.broadcast %72 : f32 to vector<1x256xf32>
    %76 = arith.mulf %75, %74 : vector<1x256xf32>
    %77 = arith.addf %71, %76 : vector<1x256xf32>
    %c2_60 = arith.constant 2 : index
    %c3_61 = arith.constant 3 : index
    %78 = memref.load %arg2[%c2_60, %c3_61] : memref<3x4xf32, #tpu.memory_space<smem>>
    %c0_62 = arith.constant 0 : index
    %c3_63 = arith.constant 3 : index
    %c0_64 = arith.constant 0 : index
    %79 = vector.load %arg4[%c0_62, %c3_63, %c0_64] : memref<1x4x256xf32, #tpu.memory_space<vmem>>, vector<1x1x256xf32>
    %80 = vector.shape_cast %79 : vector<1x1x256xf32> to vector<1x256xf32>
    %81 = vector.broadcast %78 : f32 to vector<1x256xf32>
    %82 = arith.mulf %81, %80 : vector<1x256xf32>
    %83 = arith.addf %77, %82 : vector<1x256xf32>
    %c0_65 = arith.constant 0 : index
    %c2_66 = arith.constant 2 : index
    %c0_67 = arith.constant 0 : index
    %84 = vector.load %arg5[%c0_65, %c2_66, %c0_67] : memref<1x3x256xf32, #tpu.memory_space<vmem>>, vector<1x1x256xf32>
    %85 = vector.shape_cast %84 : vector<1x1x256xf32> to vector<1x256xf32>
    %86 = vector.shape_cast %83 : vector<1x256xf32> to vector<1x1x256xf32>
    tpu.vector_store %arg5[%c0_65, %c2_66, %c0_67], %86 {strides = array<i32>} : memref<1x3x256xf32, #tpu.memory_space<vmem>>, vector<1x1x256xf32>,
    return
  }
  func.func @transform_0(%arg0: i32, %arg1: i32) -> (i32, i32) {
    %c0_i32 = arith.constant 0 : i32
    %c0_i32_0 = arith.constant 0 : i32
    %c0_i32_1 = arith.constant 0 : i32
    return %c0_i32, %c0_i32_0 : i32, i32
  }
  func.func @transform_1(%arg0: i32, %arg1: i32) -> i32 {
    %c0_i32 = arith.constant 0 : i32
    %c0_i32_0 = arith.constant 0 : i32
    return %c0_i32 : i32
  }
  func.func @transform_2(%arg0: i32, %arg1: i32) -> (i32, i32, i32) {
    %c0_i32 = arith.constant 0 : i32
    %c0_i32_0 = arith.constant 0 : i32
    return %arg0, %c0_i32, %arg1 : i32, i32, i32
  }
  func.func @transform_3(%arg0: i32, %arg1: i32) -> (i32, i32, i32) {
    %c0_i32 = arith.constant 0 : i32
    %c0_i32_0 = arith.constant 0 : i32
    return %arg0, %c0_i32, %arg1 : i32, i32, i32
  }
}

</mosaic_0001>

<llo_original>
// kernel: tpu_custom_call.1
$region0: #{tpu_custom_call.1}
  #allocation0 [shape = 'u32[]', space=smem, size = 0x4, offset = 0x4, fixed_abs, tag = 'smem constant byte address 0x4 - core index']
  #allocation1 [shape = 'u32[144,128]{1,0:T(1,128)}', space=vmem, size = 0x12000, scoped, tag = 'internal scratch']
  %s0 = inlined_call_operand.hbm [shape: f32[3,4], index: 0, kind: input, shape index: {}]
  %s1 = inlined_call_operand.vmem [shape: f32[3], index: 1, kind: input, shape index: {}]
  %s2 = inlined_call_operand.hbm [shape: f32[2,4,256], index: 2, kind: input, shape index: {}]
  %s3 = inlined_call_operand.vmem [shape: f32[2,3,256], index: 3, kind: output, shape index: {}]
  %s4 = sld [smem:[#allocation0]]
  $region57: #{tpu_custom_call.1} parent=0
    _
  %s6 = ssub.s32 1, %s4
  %s7 = scalar_select 0, %s6, %s4
  $region1: #{tpu_custom_call.1} parent=0
    #allocation2 [shape = 'u8[2048]{0}', space=smem, size = 0x800, scoped, tag = 'input window, operand 0, single buffered']
    #allocation3 [shape = 's32[2]{0}', space=sflag, size = 0x8, scoped, tag = 'scoped memory for tpu_custom_call.1']
    #allocation4 [shape = 's32[2]{0}', space=sflag, size = 0x8, scoped, tag = 'scoped memory for tpu_custom_call.1']
    #allocation5 [shape = 's32[2]{0}', space=sflag, size = 0x8, scoped, tag = 'scoped memory for tpu_custom_call.1']
    #allocation6 [shape = 'u8[512]{0}', space=smem, size = 0x200, scoped, tag = 'input window, operand 1, single buffered']
    #allocation7 [shape = 'u8[8192]{0}', space=vmem, size = 0x2000, scoped, tag = 'input window, operand 2']
    %8 = vsyncpa [#allocation4], 0
    %9 = vsyncpa [#allocation5], 0
    %10 = vsyncpa [#allocation3], 0
    %s11 = scalar_lea.sflag [#allocation3], 1
    %12 = vsyncpa %s11, 0
    loop: start=0, step=1, limit=4
    $region2: #{tpu_custom_call.1} parent=1 // loop_pre_header
      _
    $region3: #{tpu_custom_call.1} parent=1 // loop_header
      %s14 = sphi 0, %s18
      %p15 = scmp.ge.s32.totalorder %s14, 4
      %s21 = sphi 0, %s33
      %s22 = sphi 0, %s29
      %s23 = sphi 0, %s21
      %s24 = sphi 0, %s22
      %s25 = sphi 0, %s23
      %s26 = sphi 0, %s24
      %s34 = sphi 0, %s34
      %s36 = sphi 0, %s34
      %s37 = sphi 0, %s36
      %s51 = sphi 0, %s37
      %s55 = sphi 0, %s55
      %s57 = sphi 0, %s55
      %s58 = sphi 0, %s57
      %s72 = sphi 0, %s58
      %s80 = sphi 0, %s82
      %s83 = sphi 0, %s80
      %s84 = sphi 0, %s83
      %s100 = sphi 0, %s84
      %s108 = sphi 0, %s110
      %s111 = sphi 0, %s108
      %s112 = sphi 0, %s111
      %s128 = sphi 0, %s112
    $region4: #{tpu_custom_call.1} parent=1 // loop_header_branch
      %17 = sbr.rel (%p15) target = $region8
    $region5: #{tpu_custom_call.1} parent=1 // loop_body
      %s19 = ssub.s32 %s14, 1
      %s20 = ssub.s32 %s14, 2
      %s27 = sadd.s32 1, %s22
      %p28 = scmp.ge.s32.totalorder %s27, 1
      %s29 = scalar_select %p28, 0, %s27
      %s30 = sadd.s32 1, %s21
      %s31 = scalar_select %p28, %s30, %s21
      %p32 = scmp.ge.s32.totalorder %s31, 2
      %s33 = scalar_select %p32, 0, %s31
      %s35 = sadd.s32 %s34, 1
      %p38 = scmp.eq.s32.totalorder %s14, 1
      %p39 = scmp.ne.s32.totalorder %s34, %s36
      %p40 = scmp.eq.s32.totalorder %s14, 0
      %p41 = por %p39, %p40
      %p42 = scmp.ne.s32.totalorder %s34, %s36
      %p43 = scmp.eq.s32.totalorder %s19, 1
      %p44 = por %p42, %p43
      %p45 = scmp.ne.s32.totalorder %s36, %s37
      %p46 = scmp.eq.s32.totalorder %s19, 0
      %p47 = por %p45, %p46
      %p48 = scmp.ne.s32.totalorder %s36, %s37
      %p49 = scmp.eq.s32.totalorder %s20, 1
      %p50 = por %p48, %p49
      %p52 = scmp.ne.s32.totalorder %s37, %s51
      %p53 = scmp.eq.s32.totalorder %s20, 0
      %p54 = por %p52, %p53
      %s56 = sadd.s32 %s55, 1
      %p59 = scmp.eq.s32.totalorder %s14, 1
      %p60 = scmp.ne.s32.totalorder %s55, %s57
      %p61 = scmp.eq.s32.totalorder %s14, 0
      %p62 = por %p60, %p61
      %p63 = scmp.ne.s32.totalorder %s55, %s57
      %p64 = scmp.eq.s32.totalorder %s19, 1
      %p65 = por %p63, %p64
      %p66 = scmp.ne.s32.totalorder %s57, %s58
      %p67 = scmp.eq.s32.totalorder %s19, 0
      %p68 = por %p66, %p67
      %p69 = scmp.ne.s32.totalorder %s57, %s58
      %p70 = scmp.eq.s32.totalorder %s20, 1
      %p71 = por %p69, %p70
      %p73 = scmp.ne.s32.totalorder %s58, %s72
      %p74 = scmp.eq.s32.totalorder %s20, 0
      %p75 = por %p73, %p74
      %s76 = ssub.s32 %s21, %s33
      %s77 = ssub.s32 %s22, %s29
      %s78 = sor.u32 %s76, %s77
      %p79 = scmp.eq.s32.totalorder %s78, 0
      %s81 = sadd.s32 %s80, 1
      %s82 = scalar_select %p79, %s80, %s81
      %p85 = pneg %p79
      %p86 = scmp.eq.s32.totalorder %s14, 1
      %p87 = por %p85, %p86
      %p88 = scmp.ne.s32.totalorder %s80, %s83
      %p89 = scmp.eq.s32.totalorder %s14, 0
      %p90 = por %p88, %p89
      %p91 = scmp.ne.s32.totalorder %s80, %s83
      %p92 = scmp.eq.s32.totalorder %s19, 1
      %p93 = por %p91, %p92
      %p94 = scmp.ne.s32.totalorder %s83, %s84
      %p95 = scmp.eq.s32.totalorder %s19, 0
      %p96 = por %p94, %p95
      %p97 = scmp.ne.s32.totalorder %s83, %s84
      %p98 = scmp.eq.s32.totalorder %s20, 1
      %p99 = por %p97, %p98
      %p101 = scmp.ne.s32.totalorder %s84, %s100
      %p102 = scmp.eq.s32.totalorder %s20, 0
      %p103 = por %p101, %p102
      %s104 = ssub.s32 %s21, %s33
      %s105 = ssub.s32 %s22, %s29
      %s106 = sor.u32 %s104, %s105
      %p107 = scmp.eq.s32.totalorder %s106, 0
      %s109 = sadd.s32 %s108, 1
      %s110 = scalar_select %p107, %s108, %s109
      %p113 = pneg %p107
      %p114 = scmp.eq.s32.totalorder %s14, 1
      %p115 = por %p113, %p114
      %p116 = scmp.ne.s32.totalorder %s108, %s111
      %p117 = scmp.eq.s32.totalorder %s14, 0
      %p118 = por %p116, %p117
      %p119 = scmp.ne.s32.totalorder %s108, %s111
      %p120 = scmp.eq.s32.totalorder %s19, 1
      %p121 = por %p119, %p120
      %p122 = scmp.ne.s32.totalorder %s111, %s112
      %p123 = scmp.eq.s32.totalorder %s19, 0
      %p124 = por %p122, %p123
      %p125 = scmp.ne.s32.totalorder %s111, %s112
      %p126 = scmp.eq.s32.totalorder %s20, 1
      %p127 = por %p125, %p126
      %p129 = scmp.ne.s32.totalorder %s112, %s128
      %p130 = scmp.eq.s32.totalorder %s20, 0
      %p131 = por %p129, %p130
      %p132 = scmp.le.s32.totalorder 1, %s14
      %p133 = scmp.lt.s32.totalorder %s14, 3
      %p134 = pnand %p132, %p133
      %p135 = pneg %p134
      // Predicated region
      $region9: #{tpu_custom_call.1} parent=5 // pred_check
        _
      $region10: #{tpu_custom_call.1} parent=5 // pred_check_branch
        %137 = sbr.rel (%p134) target = $region12
      $region11: #{tpu_custom_call.1} parent=5 // pred_region
        %s138 = ssub.s32 %s14, 1
        // Predicated region
        $region13: #{tpu_custom_call.1} parent=11 // pred_check
          %p139 = pneg %p47
        $region14: #{tpu_custom_call.1} parent=11 // pred_check_branch
          %141 = sbr.rel (%p139) target = $region16
        $region15: #{tpu_custom_call.1} parent=11 // pred_region
          %s143 = ssub.s32 64, 64
          %144 = vsyncadd [#allocation4], %s143
          %147 = dma.hbm_to_smem %s0, 64, [#allocation2], [#allocation4]
        $region16: #{tpu_custom_call.1} parent=11 // pred_fallthru
          _
        // Predicated region
        $region17: #{tpu_custom_call.1} parent=11 // pred_check
          %p148 = pneg %p68
        $region18: #{tpu_custom_call.1} parent=11 // pred_check_branch
          %150 = sbr.rel (%p148) target = $region20
        $region19: #{tpu_custom_call.1} parent=11 // pred_region
          %s152 = ssub.s32 16, 16
          %153 = vsyncadd [#allocation5], %s152
          %s155 = sshll.u32 %s1, 4
          %s156 = int_to_ptr.vmem [resolvable:$true] %s155
          %158 = dma.vmem_to_smem %s156, 16, [#allocation6], [#allocation5]
        $region20: #{tpu_custom_call.1} parent=11 // pred_fallthru
          _
      $region12: #{tpu_custom_call.1} parent=5 // pred_fallthru
        _
      %p159 = scmp.lt.s32.totalorder %s14, 2
      // Predicated region
      $region21: #{tpu_custom_call.1} parent=5 // pred_check
        %p160 = pneg %p159
      $region22: #{tpu_custom_call.1} parent=5 // pred_check_branch
        %162 = sbr.rel (%p160) target = $region24
      $region23: #{tpu_custom_call.1} parent=5 // pred_region
        // Predicated region
        $region25: #{tpu_custom_call.1} parent=23 // pred_check
          %p163 = pneg %p90
        $region26: #{tpu_custom_call.1} parent=23 // pred_check_branch
          %165 = sbr.rel (%p163) target = $region28
        $region27: #{tpu_custom_call.1} parent=23 // pred_region
          %s166 = sand.u32 %s80, 1
          %s167 = scalar_lea.sflag [#allocation3], %s166
          %s168 = sand.u32 %s80, 1
          %s169 = smul.addr %s168, 8
          %s170 = scalar_lea.vmem [#allocation7], %s169
          %s171 = smul.u32 2, %s22
          %s173 = ssub.s32 128, 128
          %174 = vsyncadd %s167, %s173
          %s175 = smul.addr %s21, 2
          %s176 = sadd.s32 %s171, %s175
          %s177 = smul.addr %s176, 64
          %s178 = scalar_lea.hbm %s2, %s177
          %s180 = sshll.u32 %s170, 4
          %s181 = int_to_ptr.vmem [resolvable:$true] %s180
          %183 = dma.hbm_to_vmem [thread:$0]  %s178, 128, %s181, %s167
        $region28: #{tpu_custom_call.1} parent=23 // pred_fallthru
          _
      $region24: #{tpu_custom_call.1} parent=5 // pred_fallthru
        _
      %p184 = scmp.le.s32.totalorder 1, %s14
      %p185 = scmp.lt.s32.totalorder %s14, 3
      %p186 = pnand %p184, %p185
      %p187 = pneg %p186
      // Predicated region
      $region29: #{tpu_custom_call.1} parent=5 // pred_check
        _
      $region30: #{tpu_custom_call.1} parent=5 // pred_check_branch
        %189 = sbr.rel (%p186) target = $region32
      $region31: #{tpu_custom_call.1} parent=5 // pred_region
        %s190 = ssub.s32 %s14, 1
        // Predicated region
        $region33: #{tpu_custom_call.1} parent=31 // pred_check
          %p191 = pneg %p47
        $region34: #{tpu_custom_call.1} parent=31 // pred_check_branch
          %193 = sbr.rel (%p191) target = $region36
        $region35: #{tpu_custom_call.1} parent=31 // pred_region
          %194 = dma.done [#allocation4], 64
        $region36: #{tpu_custom_call.1} parent=31 // pred_fallthru
          _
        // Predicated region
        $region37: #{tpu_custom_call.1} parent=31 // pred_check
          %p195 = pneg %p68
        $region38: #{tpu_custom_call.1} parent=31 // pred_check_branch
          %197 = sbr.rel (%p195) target = $region40
        $region39: #{tpu_custom_call.1} parent=31 // pred_region
          %198 = dma.done [#allocation5], 16
        $region40: #{tpu_custom_call.1} parent=31 // pred_fallthru
          _
        %s199 = sand.u32 %s83, 1
        %s200 = scalar_lea.sflag [#allocation3], %s199
        %s201 = sand.u32 %s83, 1
        %s202 = smul.addr %s201, 8
        %s203 = scalar_lea.vmem [#allocation7], %s202
        // Predicated region
        $region41: #{tpu_custom_call.1} parent=31 // pred_check
          %p204 = pneg %p96
        $region42: #{tpu_custom_call.1} parent=31 // pred_check_branch
          %206 = sbr.rel (%p204) target = $region44
        $region43: #{tpu_custom_call.1} parent=31 // pred_region
          %207 = dma.done %s200, 128
        $region44: #{tpu_custom_call.1} parent=31 // pred_fallthru
          _
        %208 = sfence
        %p209 = pneg %p47
        %p210 = pneg %p44
        %p211 = pneg %p68
        %p212 = pneg %p65
        %s213 = sand.u32 %s83, 1
        %s214 = scalar_lea.sflag [#allocation3], %s213
        %s215 = sand.u32 %s83, 1
        %s216 = smul.addr %s215, 8
        %s217 = scalar_lea.vmem [#allocation7], %s216
        %p218 = pneg %p96
        %p219 = pneg %p93
        %p220 = pneg %p124
        %p221 = pneg %p121
        %s222 = smul.u32 2, %s24
        %p223 = scmp.lt.s32.totalorder %s23, 1
        %s224 = scalar_select %p223, %s23, 1
        %p225 = scmp.lt.s32.totalorder %s222, 1
        %s226 = scalar_select %p225, %s222, 1
        %s227 = smul.addr %s224, 2
        %s228 = sadd.s32 %s226, %s227
        %s229 = smul.addr %s228, 4
        %s230 = scalar_lea.vmem %s3, %s229
        %s231 = smul.u32 2, %s24
        %s232 = smul.u32 2, %s24
        %p233 = scmp.lt.s32.totalorder %s23, 1
        %s234 = scalar_select %p233, %s23, 1
        %p235 = scmp.lt.s32.totalorder %s232, 1
        %s236 = scalar_select %p235, %s232, 1
        %s237 = smul.addr %s234, 2
        %s238 = sadd.s32 %s236, %s237
        %s239 = smul.addr %s238, 4
        %s240 = scalar_lea.vmem %s3, %s239
        %s241 = smul.u32 2, %s24
        %s242 = sld [smem:[#allocation6]]
        %v243 = vstv %s242
        %s244 = sld [smem:[#allocation2]]
        %v245 = vld [vmem:[%s203] ss:$4 sm:$0x3]
        %v246 = vstv %s244
        %v247 = vmul.f32 %v246, %v245
        %v248 = vadd.f32 %v243, %v247
        %s249 = sld [smem:[#allocation2 + $0x1]]
        %s250 = scalar_lea.vmem %s203, 1 [#allocation7]
        %v251 = vld [vmem:[%s250] ss:$4 sm:$0x3]
        %v252 = vstv %s249
        %v253 = vmul.f32 %v252, %v251
        %v254 = vadd.f32 %v248, %v253
        %s255 = sld [smem:[#allocation2 + $0x2]]
        %s256 = scalar_lea.vmem %s203, 2 [#allocation7]
        %v257 = vld [vmem:[%s256] ss:$4 sm:$0x3]
        %v258 = vstv %s255
        %v259 = vmul.f32 %v258, %v257
        %v260 = vadd.f32 %v254, %v259
        %s261 = sld [smem:[#allocation2 + $0x3]]
        %s262 = scalar_lea.vmem %s203, 3 [#allocation7]
        %v263 = vld [vmem:[%s262] ss:$4 sm:$0x3]
        %v264 = vstv %s261
        %v265 = vmul.f32 %v264, %v263
        %v266 = vadd.f32 %v260, %v265
        %v267 = vlaneseq
        %vm268 = vcmp.ge.s32.totalorder %v267, 0
        %vm269 = vcmp.lt.s32.totalorder %v267, 256
        %vm270 = vmand %vm268, %vm269
        %271 = vst.msk [vmem:[%s240] ss:$4 sm:$0x3] %vm270, %v266
        %s272 = sld [smem:[#allocation6 + $0x1]]
        %v273 = vstv %s272
        %s274 = sld [smem:[#allocation2 + $0x80]]
        %v275 = vld [vmem:[%s203] ss:$4 sm:$0x3]
        %v276 = vstv %s274
        %v277 = vmul.f32 %v276, %v275
        %v278 = vadd.f32 %v273, %v277
        %s279 = sld [smem:[#allocation2 + $0x81]]
        %v280 = vld [vmem:[%s250] ss:$4 sm:$0x3]
        %v281 = vstv %s279
        %v282 = vmul.f32 %v281, %v280
        %v283 = vadd.f32 %v278, %v282
        %s284 = sld [smem:[#allocation2 + $0x82]]
        %v285 = vld [vmem:[%s256] ss:$4 sm:$0x3]
        %v286 = vstv %s284
        %v287 = vmul.f32 %v286, %v285
        %v288 = vadd.f32 %v283, %v287
        %s289 = sld [smem:[#allocation2 + $0x83]]
        %v290 = vld [vmem:[%s262] ss:$4 sm:$0x3]
        %v291 = vstv %s289
        %v292 = vmul.f32 %v291, %v290
        %v293 = vadd.f32 %v288, %v292
        %s294 = scalar_lea.vmem %s240, 1
        %295 = vst.msk [vmem:[%s294] ss:$4 sm:$0x3] %vm270, %v293
        %s296 = sld [smem:[#allocation6 + $0x2]]
        %v297 = vstv %s296
        %s298 = sld [smem:[#allocation2 + $0x100]]
        %v299 = vld [vmem:[%s203] ss:$4 sm:$0x3]
        %v300 = vstv %s298
        %v301 = vmul.f32 %v300, %v299
        %v302 = vadd.f32 %v297, %v301
        %s303 = sld [smem:[#allocation2 + $0x101]]
        %v304 = vld [vmem:[%s250] ss:$4 sm:$0x3]
        %v305 = vstv %s303
        %v306 = vmul.f32 %v305, %v304
        %v307 = vadd.f32 %v302, %v306
        %s308 = sld [smem:[#allocation2 + $0x102]]
        %v309 = vld [vmem:[%s256] ss:$4 sm:$0x3]
        %v310 = vstv %s308
        %v311 = vmul.f32 %v310, %v309
        %v312 = vadd.f32 %v307, %v311
        %s313 = sld [smem:[#allocation2 + $0x103]]
        %v314 = vld [vmem:[%s262] ss:$4 sm:$0x3]
        %v315 = vstv %s313
        %v316 = vmul.f32 %v315, %v314
        %v317 = vadd.f32 %v312, %v316
        %s318 = scalar_lea.vmem %s240, 2
        %319 = vst.msk [vmem:[%s318] ss:$4 sm:$0x3] %vm270, %v317
        %s320 = smul.u32 2, %s24
        %p321 = scmp.lt.s32.totalorder %s23, 1
        %s322 = scalar_select %p321, %s23, 1
        %p323 = scmp.lt.s32.totalorder %s320, 1
        %s324 = scalar_select %p323, %s320, 1
        %s325 = smul.addr %s322, 2
        %s326 = sadd.s32 %s324, %s325
        %s327 = smul.addr %s326, 4
        %s328 = scalar_lea.vmem %s3, %s327
        // Predicated region
        $region45: #{tpu_custom_call.1} parent=31 // pred_check
          %p329 = pneg %p121
        $region46: #{tpu_custom_call.1} parent=31 // pred_check_branch
          %331 = sbr.rel (%p329) target = $region48
        $region47: #{tpu_custom_call.1} parent=31 // pred_region
          %s332 = smul.u32 2, %s24
        $region48: #{tpu_custom_call.1} parent=31 // pred_fallthru
          _
      $region32: #{tpu_custom_call.1} parent=5 // pred_fallthru
        _
      %p333 = scmp.le.s32.totalorder 2, %s14
      // Predicated region
      $region49: #{tpu_custom_call.1} parent=5 // pred_check
        %p334 = pneg %p333
      $region50: #{tpu_custom_call.1} parent=5 // pred_check_branch
        %336 = sbr.rel (%p334) target = $region52
      $region51: #{tpu_custom_call.1} parent=5 // pred_region
        %s337 = ssub.s32 %s14, 2
        // Predicated region
        $region53: #{tpu_custom_call.1} parent=51 // pred_check
          %p338 = pneg %p127
        $region54: #{tpu_custom_call.1} parent=51 // pred_check_branch
          %340 = sbr.rel (%p338) target = $region56
        $region55: #{tpu_custom_call.1} parent=51 // pred_region
          %s341 = smul.u32 2, %s26
          %p342 = scmp.lt.s32.totalorder %s25, 1
          %s343 = scalar_select %p342, %s25, 1
          %p344 = scmp.lt.s32.totalorder %s341, 1
          %s345 = scalar_select %p344, %s341, 1
          %s346 = smul.addr %s343, 2
          %s347 = sadd.s32 %s345, %s346
          %s348 = smul.addr %s347, 4
          %s349 = scalar_lea.vmem %s3, %s348
        $region56: #{tpu_custom_call.1} parent=51 // pred_fallthru
          _
      $region52: #{tpu_custom_call.1} parent=5 // pred_fallthru
        _
    $region6: #{tpu_custom_call.1} parent=1 // loop_footer
      %s18 = sadd.s32 1, %s14
    $region7: #{tpu_custom_call.1} parent=1 // loop_footer_branch
      %13 = sbr.rel target = $region3
    $region8: #{tpu_custom_call.1} parent=1 // loop_exit
      _
    %350 = vsyncpa [#allocation3], 1
    %s351 = scalar_lea.sflag [#allocation3], 1
    %352 = vsyncpa %s351, 1
    %353 = vsyncpa [#allocation4], 1
    %s354 = scalar_lea.sflag [#allocation4], 1
    %355 = vsyncpa %s354, 1
    %356 = vsyncpa [#allocation5], 1
    %s357 = scalar_lea.sflag [#allocation5], 1
    %358 = vsyncpa %s357, 1

</llo_original>
